<compile_context>
chip_gen: v7x
topology: tpu7x:2x2x1
jax: 0.10.0
libtpu: 0.0.40
codegen_flags: <defaults>
</compile_context>

<pallas_src>
import functools

import jax
import jax.numpy as jnp
from jax.experimental import pallas as pl
from jax.experimental.pallas import tpu as pltpu


N_PACK = 8  # int4 nibbles per int32 word


def _round_up(x, m):
    return (x + m - 1) // m * m


# --------------------------------------------------------------------------- #
# Kernel
# --------------------------------------------------------------------------- #
def _woq_linear_kernel(x_ref, qw_ref, sc_ref, b_ref, o_ref, acc_ref):
    k_step = pl.program_id(2)

    @pl.when(k_step == 0)
    def _init():
        acc_ref[...] = jnp.zeros_like(acc_ref)

    qw = qw_ref[...]                       # (tk//8, tn) int32, signed-code nibbles
    tk8, tn = qw.shape
    tk = tk8 * N_PACK

    # ---- int4 unpack: 8 static shift pairs (arithmetic sign extension).
    # Thanks to the prep-time repack, nibble plane e is the contiguous K slab
    # [e*tk8, (e+1)*tk8) of the tile, so the concat is sublane-aligned and cheap.
    planes = [((qw << (28 - 4 * e)) >> 28) for e in range(N_PACK)]
    w_int = jnp.concatenate(planes, axis=0)            # (tk, tn) int32 in [-8, 7]

    # ---- per-group scales -> per-row scales (sublane broadcast + collapse)
    sc = sc_ref[...]                                   # (tk // gs_eff, tn) f32
    n_grp = sc.shape[0]
    rows_per_grp = tk // n_grp
    sc_full = jnp.broadcast_to(sc[:, None, :],
                               (n_grp, rows_per_grp, tn)).reshape(tk, tn)

    # ---- dequant (zero point already folded into the signed codes) + MXU dot
    w = (w_int.astype(jnp.float32) * sc_full).astype(jnp.bfloat16)
    acc_ref[...] += jnp.dot(x_ref[...], w, preferred_element_type=jnp.float32)

    @pl.when(k_step == pl.num_programs(2) - 1)
    def _finalize():
        o_ref[...] = (acc_ref[...] + b_ref[...]).astype(o_ref.dtype)


# --------------------------------------------------------------------------- #
# One-time weight preparation (weight-load time, NOT in the per-call hot path)
# --------------------------------------------------------------------------- #
def prepare_woq_weights(qweight, scales, bias=None, *, bits=4, group_size=32,
                        qzeros=None, g_idx=None, tk=512, tn=None):
    """Unpack/re-pack the optimum-format int4 weight into the kernel layout."""
    assert bits == 4, "kernel implements the default 4-bit path"
    assert qzeros is None, "explicit zero points (zp=True) not implemented"
    assert g_idx is None, "g_idx group reordering not implemented"

    Kdiv8, N = qweight.shape
    K = Kdiv8 * N_PACK
    GS = K if group_size == -1 else group_size
    assert K % GS == 0, "kernel assumes group_size | in_features"
    assert scales.shape == (K // GS, N)

    if tn is None:
        tn = 512 if N >= 1024 else (256 if N >= 512 else 128)
    Kp = _round_up(K, tk)
    Np = _round_up(N, tn)
    tk8 = tk // N_PACK

    # 1) unpack to unsigned codes [K, N]  (optimum format: word w, nibble e = row 8w+e)
    shifts = (4 * jnp.arange(N_PACK, dtype=jnp.int32))[None, :, None]
    codes = (qweight.astype(jnp.int32)[:, None, :] >> shifts) & 0xF     # (K/8, 8, N)
    codes = codes.reshape(K, N)

    # 2) fold the implicit zero point:  (q - 8) == sign_extend_4bit(q ^ 8)
    snib = (codes ^ 8) & 0xF                       # 4-bit two's-complement of q - 8

    # 3) pad (signed-zero nibbles -> exact) and block-transpose repack so nibble
    #    plane e of each tk-row block is the contiguous K slab [e*tk8, (e+1)*tk8)
    snib = jnp.pad(snib, ((0, Kp - K), (0, Np - N)))
    snib = snib.reshape(Kp // tk, N_PACK, tk8, Np)
    bit_planes = [(snib[:, e].astype(jnp.int32) << (4 * e)) for e in range(N_PACK)]
    qw_prep = functools.reduce(jnp.bitwise_or, bit_planes).reshape(Kp // N_PACK, Np)

    # 4) scales at (near-)native group granularity; keep >= 8 rows per K tile so the
    #    scales BlockSpec stays (8,128)-legal
    sc32 = scales.astype(jnp.float32)
    if GS >= tk:
        assert GS % tk == 0
        if GS > tk:
            sc32 = jnp.repeat(sc32, GS // tk, axis=0)
        gs_eff = tk
    else:
        assert tk % GS == 0, "group_size must divide the K tile"
        gs_eff = GS
    if tk // gs_eff < 8:
        rep = (8 * gs_eff) // tk
        sc32 = jnp.repeat(sc32, rep, axis=0)
        gs_eff //= rep
    sc_prep = jnp.pad(sc32, ((0, Kp // gs_eff - sc32.shape[0]), (0, Np - N)))

    if bias is None:
        b_prep = jnp.zeros((1, Np), jnp.float32)
    else:
        b_prep = jnp.pad(bias.astype(jnp.float32).reshape(1, N),
                         ((0, 0), (0, Np - N)))

    meta = dict(K=K, N=N, Kp=Kp, Np=Np, tk=tk, tn=tn, gs_eff=gs_eff)
    return qw_prep, sc_prep, b_prep, meta


# --------------------------------------------------------------------------- #
# Per-call forward
# --------------------------------------------------------------------------- #
def weight_only_linear(x, qw_prep, sc_prep, b_prep, meta, *, out_dtype=jnp.bfloat16):
    """Forward of WeightOnlyLinear on prepared weights (optimum format, zp=False)."""
    K, N = meta["K"], meta["N"]
    Kp, Np = meta["Kp"], meta["Np"]
    tk, tn, gs_eff = meta["tk"], meta["tn"], meta["gs_eff"]

    *lead, Kin = x.shape
    assert Kin == K
    x2d = x.reshape(-1, K).astype(jnp.bfloat16)
    M = x2d.shape[0]

    # tm: multiple of 16 (bf16 sublane packing); larger for prefill-shaped M
    if M >= 1024:
        tm = 256
    elif M > 128:
        tm = 128
    else:
        tm = _round_up(M, 16)
    Mp = _round_up(M, tm)
    x2d = jnp.pad(x2d, ((0, Mp - M), (0, Kp - K)))      # zero K-pad keeps dot exact

    grid = (Mp // tm, Np // tn, Kp // tk)

    out = pl.pallas_call(
        _woq_linear_kernel,
        out_shape=jax.ShapeDtypeStruct((Mp, Np), out_dtype),
        grid_spec=pltpu.PrefetchScalarGridSpec(
            num_scalar_prefetch=0,
            grid=grid,
            in_specs=[
                pl.BlockSpec((tm, tk), lambda i, j, k: (i, k)),            # X (bf16)
                pl.BlockSpec((tk // N_PACK, tn), lambda i, j, k: (k, j)),  # packed W
                pl.BlockSpec((tk // gs_eff, tn), lambda i, j, k: (k, j)),  # scales
                pl.BlockSpec((1, tn), lambda i, j, k: (0, j)),             # bias
            ],
            out_specs=pl.BlockSpec((tm, tn), lambda i, j, k: (i, j)),
            scratch_shapes=[pltpu.VMEM((tm, tn), jnp.float32)],
        ),
        compiler_params=pltpu.CompilerParams(
            dimension_semantics=("parallel", "parallel", "arbitrary"),
            vmem_limit_bytes=32 * 1024 * 1024,
        ),
    )(x2d, qw_prep, sc_prep, b_prep)

    return out[:M, :N].reshape(*lead, N)


# --------------------------------------------------------------------------- #
# Self-test
# --------------------------------------------------------------------------- #
if __name__ == "__main__":
    # Small, module-consistent shapes: batch=2, seq=8, in=512, out=256, group=32, int4.
    B, S = 2, 8
    IN_FEATURES, OUT_FEATURES = 512, 256
    GROUP_SIZE, BITS = 32, 4

    key = jax.random.PRNGKey(0)
    kx, kw, ks, kb = jax.random.split(key, 4)

    x = jax.random.normal(kx, (B, S, IN_FEATURES), dtype=jnp.float32)

    # Unsigned 4-bit codes (optimum format stores w + 8, values in [0, 15]).
    w_codes = jax.random.randint(kw, (IN_FEATURES, OUT_FEATURES), 0, 16, dtype=jnp.int32)
    scales = jax.random.uniform(ks, (IN_FEATURES // GROUP_SIZE, OUT_FEATURES),
                                jnp.float32, 0.005, 0.02)
    bias = 0.1 * jax.random.normal(kb, (OUT_FEATURES,), dtype=jnp.float32)

    # Pack along in_features into int32 words (optimum format qweight [K/8, N]):
    # word j holds K-rows 8j..8j+7, nibble e = row 8j+e (LSB first).
    w3 = w_codes.reshape(IN_FEATURES // N_PACK, N_PACK, OUT_FEATURES)
    qweight = jnp.zeros((IN_FEATURES // N_PACK, OUT_FEATURES), jnp.int32)
    for e in range(N_PACK):
        qweight = qweight | (w3[:, e, :] << (4 * e))

    # One-time weight preparation (weight-load time), then the per-call forward.
    qw_prep, sc_prep, b_prep, meta = prepare_woq_weights(
        qweight, scales, bias, bits=BITS, group_size=GROUP_SIZE)
    y = weight_only_linear(x, qw_prep, sc_prep, b_prep, meta)
    y = jax.block_until_ready(y)

    # Pure-JAX reference of WeightOnlyLinear.forward (recover() -> F.linear),
    # with matching bf16 rounding of activations / dequantized weight.
    w_deq = (w_codes.astype(jnp.float32) - 8.0) * jnp.repeat(scales, GROUP_SIZE, axis=0)
    x_bf = x.astype(jnp.bfloat16).astype(jnp.float32)
    w_bf = w_deq.astype(jnp.bfloat16).astype(jnp.float32)
    y_ref = (x_bf.reshape(-1, IN_FEATURES) @ w_bf + bias).reshape(B, S, OUT_FEATURES)

    assert y.shape == (B, S, OUT_FEATURES)
    err = jnp.max(jnp.abs(y.astype(jnp.float32) - y_ref))
    assert jnp.allclose(y.astype(jnp.float32), y_ref, atol=5e-2, rtol=5e-2), float(err)

    print("KERNEL_OK")
</pallas_src>

<mosaic_0001>
module attributes {stable_mosaic.version = 11 : i64} {
  func.func @_woq_linear_kernel(%arg0: i32, %arg1: i32, %arg2: i32, %arg3: memref<16x512xbf16, #tpu.memory_space<vmem>>, %arg4: memref<64x128xi32, #tpu.memory_space<vmem>>, %arg5: memref<16x128xf32, #tpu.memory_space<vmem>>, %arg6: memref<1x128xf32, #tpu.memory_space<vmem>>, %arg7: memref<16x128xbf16, #tpu.memory_space<vmem>>, %arg8: memref<16x128xf32, #tpu.memory_space<vmem>>) attributes {dimension_semantics = [#tpu.dimension_semantics<parallel>, #tpu.dimension_semantics<parallel>, #tpu.dimension_semantics<arbitrary>], iteration_bounds = array<i64: 1, 2, 1>, scalar_prefetch = 0 : i64, scratch_operands = 1 : i64, tpu.core_type = #tpu.core_type<tc>, window_params = [{transform_indices = @transform_0, window_bounds = array<i64: 16, 512>}, {transform_indices = @transform_1, window_bounds = array<i64: 64, 128>}, {transform_indices = @transform_2, window_bounds = array<i64: 16, 128>}, {transform_indices = @transform_3, window_bounds = array<i64: 1, 128>}, {transform_indices = @transform_4, window_bounds = array<i64: 16, 128>}]} {
    %c0_i32 = arith.constant 0 : i32
    %0 = arith.cmpi eq, %arg2, %c0_i32 : i32
    %1 = arith.extui %0 : i1 to i32
    %c0_i32_0 = arith.constant 0 : i32
    %2 = arith.cmpi ne, %1, %c0_i32_0 : i32
    scf.if %2 {
      %cst_21 = arith.constant 0.000000e+00 : f32
      %53 = vector.broadcast %cst_21 : f32 to vector<16x128xf32>
      %c0_22 = arith.constant 0 : index
      %c0_23 = arith.constant 0 : index
      %54 = vector.load %arg8[%c0_22, %c0_23] : memref<16x128xf32, #tpu.memory_space<vmem>>, vector<16x128xf32>
      tpu.vector_store %arg8[%c0_22, %c0_23], %53 {strides = array<i32>} : memref<16x128xf32, #tpu.memory_space<vmem>>, vector<16x128xf32>,
    } else {
    }
    %c0 = arith.constant 0 : index
    %c0_1 = arith.constant 0 : index
    %3 = vector.load %arg4[%c0, %c0_1] : memref<64x128xi32, #tpu.memory_space<vmem>>, vector<64x128xi32>
    %c28_i32 = arith.constant 28 : i32
    %4 = vector.broadcast %c28_i32 : i32 to vector<64x128xi32>
    %5 = arith.shli %3, %4 : vector<64x128xi32>
    %c28_i32_2 = arith.constant 28 : i32
    %6 = vector.broadcast %c28_i32_2 : i32 to vector<64x128xi32>
    %7 = arith.shrsi %5, %6 : vector<64x128xi32>
    %c24_i32 = arith.constant 24 : i32
    %8 = vector.broadcast %c24_i32 : i32 to vector<64x128xi32>
    %9 = arith.shli %3, %8 : vector<64x128xi32>
    %c28_i32_3 = arith.constant 28 : i32
    %10 = vector.broadcast %c28_i32_3 : i32 to vector<64x128xi32>
    %11 = arith.shrsi %9, %10 : vector<64x128xi32>
    %c20_i32 = arith.constant 20 : i32
    %12 = vector.broadcast %c20_i32 : i32 to vector<64x128xi32>
    %13 = arith.shli %3, %12 : vector<64x128xi32>
    %c28_i32_4 = arith.constant 28 : i32
    %14 = vector.broadcast %c28_i32_4 : i32 to vector<64x128xi32>
    %15 = arith.shrsi %13, %14 : vector<64x128xi32>
    %c16_i32 = arith.constant 16 : i32
    %16 = vector.broadcast %c16_i32 : i32 to vector<64x128xi32>
    %17 = arith.shli %3, %16 : vector<64x128xi32>
    %c28_i32_5 = arith.constant 28 : i32
    %18 = vector.broadcast %c28_i32_5 : i32 to vector<64x128xi32>
    %19 = arith.shrsi %17, %18 : vector<64x128xi32>
    %c12_i32 = arith.constant 12 : i32
    %20 = vector.broadcast %c12_i32 : i32 to vector<64x128xi32>
    %21 = arith.shli %3, %20 : vector<64x128xi32>
    %c28_i32_6 = arith.constant 28 : i32
    %22 = vector.broadcast %c28_i32_6 : i32 to vector<64x128xi32>
    %23 = arith.shrsi %21, %22 : vector<64x128xi32>
    %c8_i32 = arith.constant 8 : i32
    %24 = vector.broadcast %c8_i32 : i32 to vector<64x128xi32>
    %25 = arith.shli %3, %24 : vector<64x128xi32>
    %c28_i32_7 = arith.constant 28 : i32
    %26 = vector.broadcast %c28_i32_7 : i32 to vector<64x128xi32>
    %27 = arith.shrsi %25, %26 : vector<64x128xi32>
    %c4_i32 = arith.constant 4 : i32
    %28 = vector.broadcast %c4_i32 : i32 to vector<64x128xi32>
    %29 = arith.shli %3, %28 : vector<64x128xi32>
    %c28_i32_8 = arith.constant 28 : i32
    %30 = vector.broadcast %c28_i32_8 : i32 to vector<64x128xi32>
    %31 = arith.shrsi %29, %30 : vector<64x128xi32>
    %c0_i32_9 = arith.constant 0 : i32
    %32 = vector.broadcast %c0_i32_9 : i32 to vector<64x128xi32>
    %33 = arith.shli %3, %32 : vector<64x128xi32>
    %c28_i32_10 = arith.constant 28 : i32
    %34 = vector.broadcast %c28_i32_10 : i32 to vector<64x128xi32>
    %35 = arith.shrsi %33, %34 : vector<64x128xi32>
    %36 = tpu.concatenate %7, %11, %15, %19, %23, %27, %31, %35 in 0 : vector<64x128xi32>, vector<64x128xi32>, vector<64x128xi32>, vector<64x128xi32>, vector<64x128xi32>, vector<64x128xi32>, vector<64x128xi32>, vector<64x128xi32> -> vector<512x128xi32>
    %c0_11 = arith.constant 0 : index
    %c0_12 = arith.constant 0 : index
    %37 = vector.load %arg5[%c0_11, %c0_12] : memref<16x128xf32, #tpu.memory_space<vmem>>, vector<16x128xf32>
    %38 = vector.shape_cast %37 : vector<16x128xf32> to vector<16x1x128xf32>
    %39 = vector.shape_cast %38 : vector<16x1x128xf32> to vector<16x1x128xf32>
    %40 = vector.broadcast %39 : vector<16x1x128xf32> to vector<16x32x128xf32>
    %41 = vector.shape_cast %40 : vector<16x32x128xf32> to vector<512x128xf32>
    %42 = arith.sitofp %36 : vector<512x128xi32> to vector<512x128xf32>
    %43 = arith.mulf %42, %41 : vector<512x128xf32>
    %44 = arith.truncf %43 : vector<512x128xf32> to vector<512x128xbf16>
    %c0_13 = arith.constant 0 : index
    %c0_14 = arith.constant 0 : index
    %45 = vector.load %arg8[%c0_13, %c0_14] : memref<16x128xf32, #tpu.memory_space<vmem>>, vector<16x128xf32>
    %c0_15 = arith.constant 0 : index
    %c0_16 = arith.constant 0 : index
    %46 = vector.load %arg3[%c0_15, %c0_16] : memref<16x512xbf16, #tpu.memory_space<vmem>>, vector<16x512xbf16>
    %cst = arith.constant dense<0.000000e+00> : vector<16x128xf32>
    %47 = tpu.matmul %46, %44, %cst {dimension_numbers = #tpu.dot_dimension_numbers<[1], [0], [0], [1], [0, 0, 1, 1], [], []>} : vector<16x512xbf16>, vector<512x128xbf16>, vector<16x128xf32> -> vector<16x128xf32>
    %48 = arith.addf %45, %47 : vector<16x128xf32>
    %c0_17 = arith.constant 0 : index
    %c0_18 = arith.constant 0 : index
    %49 = vector.load %arg8[%c0_17, %c0_18] : memref<16x128xf32, #tpu.memory_space<vmem>>, vector<16x128xf32>
    tpu.vector_store %arg8[%c0_17, %c0_18], %48 {strides = array<i32>} : memref<16x128xf32, #tpu.memory_space<vmem>>, vector<16x128xf32>,
    %c0_i32_19 = arith.constant 0 : i32
    %50 = arith.cmpi eq, %arg2, %c0_i32_19 : i32
    %51 = arith.extui %50 : i1 to i32
    %c0_i32_20 = arith.constant 0 : i32
    %52 = arith.cmpi ne, %51, %c0_i32_20 : i32
    scf.if %52 {
      %c0_21 = arith.constant 0 : index
      %c0_22 = arith.constant 0 : index
      %53 = vector.load %arg8[%c0_21, %c0_22] : memref<16x128xf32, #tpu.memory_space<vmem>>, vector<16x128xf32>
      %c0_23 = arith.constant 0 : index
      %c0_24 = arith.constant 0 : index
      %54 = vector.load %arg6[%c0_23, %c0_24] : memref<1x128xf32, #tpu.memory_space<vmem>>, vector<1x128xf32>
      %55 = vector.broadcast %54 : vector<1x128xf32> to vector<16x128xf32>
      %56 = arith.addf %53, %55 : vector<16x128xf32>
      %57 = arith.truncf %56 : vector<16x128xf32> to vector<16x128xbf16>
      %c0_25 = arith.constant 0 : index
      %c0_26 = arith.constant 0 : index
      %58 = vector.load %arg7[%c0_25, %c0_26] : memref<16x128xbf16, #tpu.memory_space<vmem>>, vector<16x128xbf16>
      tpu.vector_store %arg7[%c0_25, %c0_26], %57 {strides = array<i32>} : memref<16x128xbf16, #tpu.memory_space<vmem>>, vector<16x128xbf16>,
    } else {
    }
    return
  }
  func.func @transform_0(%arg0: i32, %arg1: i32, %arg2: i32) -> (i32, i32) {
    %c0_i32 = arith.constant 0 : i32
    return %arg0, %arg2 : i32, i32
  }
  func.func @transform_1(%arg0: i32, %arg1: i32, %arg2: i32) -> (i32, i32) {
    %c0_i32 = arith.constant 0 : i32
    return %arg2, %arg1 : i32, i32
  }
  func.func @transform_2(%arg0: i32, %arg1: i32, %arg2: i32) -> (i32, i32) {
    %c0_i32 = arith.constant 0 : i32
    return %arg2, %arg1 : i32, i32
  }
  func.func @transform_3(%arg0: i32, %arg1: i32, %arg2: i32) -> (i32, i32) {
    %c0_i32 = arith.constant 0 : i32
    %c0_i32_0 = arith.constant 0 : i32
    return %c0_i32, %arg1 : i32, i32
  }
  func.func @transform_4(%arg0: i32, %arg1: i32, %arg2: i32) -> (i32, i32) {
    %c0_i32 = arith.constant 0 : i32
    return %arg0, %arg1 : i32, i32
  }
}

</mosaic_0001>

<llo_original>
// kernel: tpu_custom_call.1
$region0: #{tpu_custom_call.1}
  #allocation0 [shape = 'u32[]', space=smem, size = 0x4, offset = 0x4, fixed_abs, tag = 'smem constant byte address 0x4 - core index']
  #allocation1 [shape = 'u32[144,128]{1,0:T(1,128)}', space=vmem, size = 0x12000, scoped, tag = 'internal scratch']
  #allocation2 [shape = 'f32[16,128]{1,0:T(8,128)}', space=vmem, size = 0x2000, scoped, tag = 'scratch operand']
  %s0 = inlined_call_operand.hbm [shape: bf16[16,512], index: 0, kind: input, shape index: {}]
  %s1 = inlined_call_operand.hbm [shape: s32[64,256], index: 1, kind: input, shape index: {}]
  %s2 = inlined_call_operand.hbm [shape: f32[16,256], index: 2, kind: input, shape index: {}]
  %s3 = inlined_call_operand.vmem [shape: f32[1,256], index: 3, kind: input, shape index: {}]
  %s4 = inlined_call_operand.hbm [shape: bf16[16,256], index: 4, kind: output, shape index: {}]
  %s5 = sld [smem:[#allocation0]]
  $region69: #{tpu_custom_call.1} parent=0
    _
  %s7 = ssub.s32 1, %s5
  %s8 = scalar_select 0, %s7, %s5
  $region1: #{tpu_custom_call.1} parent=0
    #allocation3 [shape = 'u8[16384]{0}', space=vmem, size = 0x4000, scoped, tag = 'input window, operand 0, single buffered']
    #allocation4 [shape = 's32[2]{0}', space=sflag, size = 0x8, scoped, tag = 'scoped memory for tpu_custom_call.1']
    #allocation5 [shape = 's32[2]{0}', space=sflag, size = 0x8, scoped, tag = 'scoped memory for tpu_custom_call.1']
    #allocation6 [shape = 'u8[65536]{0}', space=vmem, size = 0x10000, scoped, tag = 'input window, operand 1']
    #allocation7 [shape = 's32[2]{0}', space=sflag, size = 0x8, scoped, tag = 'scoped memory for tpu_custom_call.1']
    #allocation8 [shape = 'u8[16384]{0}', space=vmem, size = 0x4000, scoped, tag = 'input window, operand 2']
    #allocation9 [shape = 'u8[8192]{0}', space=vmem, size = 0x2000, scoped, tag = 'output window, operand 0']
    %9 = vsyncpa [#allocation4], 0
    %10 = vsyncpa [#allocation7], 0
    %s11 = scalar_lea.sflag [#allocation7], 1
    %12 = vsyncpa %s11, 0
    %13 = vsyncpa [#allocation5], 0
    %s14 = scalar_lea.sflag [#allocation5], 1
    %15 = vsyncpa %s14, 0
    loop: start=0, step=1, limit=4
    $region2: #{tpu_custom_call.1} parent=1 // loop_pre_header
      _
    $region3: #{tpu_custom_call.1} parent=1 // loop_header
      %s17 = sphi 0, %s21
      %p18 = scmp.ge.s32.totalorder %s17, 4
      %s24 = sphi 0, %s43
      %s25 = sphi 0, %s39
      %s26 = sphi 0, %s35
      %s27 = sphi 0, %s24
      %s28 = sphi 0, %s25
      %s29 = sphi 0, %s26
      %s30 = sphi 0, %s27
      %s31 = sphi 0, %s28
      %s32 = sphi 0, %s29
      %s48 = sphi 0, %s50
      %s51 = sphi 0, %s48
      %s52 = sphi 0, %s51
      %s68 = sphi 0, %s52
      %s76 = sphi 0, %s78
      %s79 = sphi 0, %s76
      %s80 = sphi 0, %s79
      %s96 = sphi 0, %s80
      %s104 = sphi 0, %s106
      %s107 = sphi 0, %s104
      %s108 = sphi 0, %s107
      %s124 = sphi 0, %s108
      %s130 = sphi 0, %s132
      %s133 = sphi 0, %s130
      %s134 = sphi 0, %s133
      %s150 = sphi 0, %s134
      %s158 = sphi 0, %s160
      %s161 = sphi 0, %s158
      %s162 = sphi 0, %s161
      %s178 = sphi 0, %s162
    $region4: #{tpu_custom_call.1} parent=1 // loop_header_branch
      %20 = sbr.rel (%p18) target = $region8
    $region5: #{tpu_custom_call.1} parent=1 // loop_body
      %s22 = ssub.s32 %s17, 1
      %s23 = ssub.s32 %s17, 2
      %s33 = sadd.s32 1, %s26
      %p34 = scmp.ge.s32.totalorder %s33, 1
      %s35 = scalar_select %p34, 0, %s33
      %s36 = sadd.s32 1, %s25
      %s37 = scalar_select %p34, %s36, %s25
      %p38 = scmp.ge.s32.totalorder %s37, 2
      %s39 = scalar_select %p38, 0, %s37
      %s40 = sadd.s32 1, %s24
      %s41 = scalar_select %p38, %s40, %s24
      %p42 = scmp.ge.s32.totalorder %s41, 1
      %s43 = scalar_select %p42, 0, %s41
      %s44 = ssub.s32 %s24, %s43
      %s45 = ssub.s32 %s26, %s35
      %s46 = sor.u32 %s44, %s45
      %p47 = scmp.eq.s32.totalorder %s46, 0
      %s49 = sadd.s32 %s48, 1
      %s50 = scalar_select %p47, %s48, %s49
      %p53 = pneg %p47
      %p54 = scmp.eq.s32.totalorder %s17, 1
      %p55 = por %p53, %p54
      %p56 = scmp.ne.s32.totalorder %s48, %s51
      %p57 = scmp.eq.s32.totalorder %s17, 0
      %p58 = por %p56, %p57
      %p59 = scmp.ne.s32.totalorder %s48, %s51
      %p60 = scmp.eq.s32.totalorder %s22, 1
      %p61 = por %p59, %p60
      %p62 = scmp.ne.s32.totalorder %s51, %s52
      %p63 = scmp.eq.s32.totalorder %s22, 0
      %p64 = por %p62, %p63
      %p65 = scmp.ne.s32.totalorder %s51, %s52
      %p66 = scmp.eq.s32.totalorder %s23, 1
      %p67 = por %p65, %p66
      %p69 = scmp.ne.s32.totalorder %s52, %s68
      %p70 = scmp.eq.s32.totalorder %s23, 0
      %p71 = por %p69, %p70
      %s72 = ssub.s32 %s26, %s35
      %s73 = ssub.s32 %s25, %s39
      %s74 = sor.u32 %s72, %s73
      %p75 = scmp.eq.s32.totalorder %s74, 0
      %s77 = sadd.s32 %s76, 1
      %s78 = scalar_select %p75, %s76, %s77
      %p81 = pneg %p75
      %p82 = scmp.eq.s32.totalorder %s17, 1
      %p83 = por %p81, %p82
      %p84 = scmp.ne.s32.totalorder %s76, %s79
      %p85 = scmp.eq.s32.totalorder %s17, 0
      %p86 = por %p84, %p85
      %p87 = scmp.ne.s32.totalorder %s76, %s79
      %p88 = scmp.eq.s32.totalorder %s22, 1
      %p89 = por %p87, %p88
      %p90 = scmp.ne.s32.totalorder %s79, %s80
      %p91 = scmp.eq.s32.totalorder %s22, 0
      %p92 = por %p90, %p91
      %p93 = scmp.ne.s32.totalorder %s79, %s80
      %p94 = scmp.eq.s32.totalorder %s23, 1
      %p95 = por %p93, %p94
      %p97 = scmp.ne.s32.totalorder %s80, %s96
      %p98 = scmp.eq.s32.totalorder %s23, 0
      %p99 = por %p97, %p98
      %s100 = ssub.s32 %s26, %s35
      %s101 = ssub.s32 %s25, %s39
      %s102 = sor.u32 %s100, %s101
      %p103 = scmp.eq.s32.totalorder %s102, 0
      %s105 = sadd.s32 %s104, 1
      %s106 = scalar_select %p103, %s104, %s105
      %p109 = pneg %p103
      %p110 = scmp.eq.s32.totalorder %s17, 1
      %p111 = por %p109, %p110
      %p112 = scmp.ne.s32.totalorder %s104, %s107
      %p113 = scmp.eq.s32.totalorder %s17, 0
      %p114 = por %p112, %p113
      %p115 = scmp.ne.s32.totalorder %s104, %s107
      %p116 = scmp.eq.s32.totalorder %s22, 1
      %p117 = por %p115, %p116
      %p118 = scmp.ne.s32.totalorder %s107, %s108
      %p119 = scmp.eq.s32.totalorder %s22, 0
      %p120 = por %p118, %p119
      %p121 = scmp.ne.s32.totalorder %s107, %s108
      %p122 = scmp.eq.s32.totalorder %s23, 1
      %p123 = por %p121, %p122
      %p125 = scmp.ne.s32.totalorder %s108, %s124
      %p126 = scmp.eq.s32.totalorder %s23, 0
      %p127 = por %p125, %p126
      %s128 = ssub.s32 %s25, %s39
      %p129 = scmp.eq.s32.totalorder %s128, 0
      %s131 = sadd.s32 %s130, 1
      %s132 = scalar_select %p129, %s130, %s131
      %p135 = pneg %p129
      %p136 = scmp.eq.s32.totalorder %s17, 1
      %p137 = por %p135, %p136
      %p138 = scmp.ne.s32.totalorder %s130, %s133
      %p139 = scmp.eq.s32.totalorder %s17, 0
      %p140 = por %p138, %p139
      %p141 = scmp.ne.s32.totalorder %s130, %s133
      %p142 = scmp.eq.s32.totalorder %s22, 1
      %p143 = por %p141, %p142
      %p144 = scmp.ne.s32.totalorder %s133, %s134
      %p145 = scmp.eq.s32.totalorder %s22, 0
      %p146 = por %p144, %p145
      %p147 = scmp.ne.s32.totalorder %s133, %s134
      %p148 = scmp.eq.s32.totalorder %s23, 1
      %p149 = por %p147, %p148
      %p151 = scmp.ne.s32.totalorder %s134, %s150
      %p152 = scmp.eq.s32.totalorder %s23, 0
      %p153 = por %p151, %p152
      %s154 = ssub.s32 %s24, %s43
      %s155 = ssub.s32 %s25, %s39
      %s156 = sor.u32 %s154, %s155
      %p157 = scmp.eq.s32.totalorder %s156, 0
      %s159 = sadd.s32 %s158, 1
      %s160 = scalar_select %p157, %s158, %s159
      %p163 = pneg %p157
      %p164 = scmp.eq.s32.totalorder %s17, 1
      %p165 = por %p163, %p164
      %p166 = scmp.ne.s32.totalorder %s158, %s161
      %p167 = scmp.eq.s32.totalorder %s17, 0
      %p168 = por %p166, %p167
      %p169 = scmp.ne.s32.totalorder %s158, %s161
      %p170 = scmp.eq.s32.totalorder %s22, 1
      %p171 = por %p169, %p170
      %p172 = scmp.ne.s32.totalorder %s161, %s162
      %p173 = scmp.eq.s32.totalorder %s22, 0
      %p174 = por %p172, %p173
      %p175 = scmp.ne.s32.totalorder %s161, %s162
      %p176 = scmp.eq.s32.totalorder %s23, 1
      %p177 = por %p175, %p176
      %p179 = scmp.ne.s32.totalorder %s162, %s178
      %p180 = scmp.eq.s32.totalorder %s23, 0
      %p181 = por %p179, %p180
      %p182 = scmp.le.s32.totalorder 1, %s17
      %p183 = scmp.lt.s32.totalorder %s17, 3
      %p184 = pnand %p182, %p183
      %p185 = pneg %p184
      // Predicated region
      $region9: #{tpu_custom_call.1} parent=5 // pred_check
        _
      $region10: #{tpu_custom_call.1} parent=5 // pred_check_branch
        %187 = sbr.rel (%p184) target = $region12
      $region11: #{tpu_custom_call.1} parent=5 // pred_region
        %s188 = ssub.s32 %s17, 1
        // Predicated region
        $region13: #{tpu_custom_call.1} parent=11 // pred_check
          %p189 = pneg %p64
        $region14: #{tpu_custom_call.1} parent=11 // pred_check_branch
          %191 = sbr.rel (%p189) target = $region16
        $region15: #{tpu_custom_call.1} parent=11 // pred_region
          %s192 = smul.u32 2, %s27
          %s193 = smul.u32 4, %s29
          %s195 = ssub.s32 512, 512
          %196 = vsyncadd [#allocation4], %s195
          %s197 = smul.addr %s192, 4
          %s198 = sadd.s32 %s193, %s197
          %s199 = smul.addr %s198, 64
          %s200 = scalar_lea.hbm %s0, %s199
          %s201 = sshll.u32 [#allocation3], 4
          %s202 = int_to_ptr.vmem [resolvable:$true] %s201
          %207 = dma.hbm_to_vmem [thread:$0]  %s200, 512, %s202, [#allocation4], 256, 256, 16
        $region16: #{tpu_custom_call.1} parent=11 // pred_fallthru
          _
      $region12: #{tpu_custom_call.1} parent=5 // pred_fallthru
        _
      %p208 = scmp.lt.s32.totalorder %s17, 2
      // Predicated region
      $region17: #{tpu_custom_call.1} parent=5 // pred_check
        %p209 = pneg %p208
      $region18: #{tpu_custom_call.1} parent=5 // pred_check_branch
        %211 = sbr.rel (%p209) target = $region20
      $region19: #{tpu_custom_call.1} parent=5 // pred_region
        // Predicated region
        $region21: #{tpu_custom_call.1} parent=19 // pred_check
          %p212 = pneg %p86
        $region22: #{tpu_custom_call.1} parent=19 // pred_check_branch
          %214 = sbr.rel (%p212) target = $region24
        $region23: #{tpu_custom_call.1} parent=19 // pred_region
          %s215 = sand.u32 %s17, 1
          %s216 = scalar_lea.sflag [#allocation7], %s215
          %s217 = sand.u32 %s76, 1
          %s218 = smul.addr %s217, 64
          %s219 = scalar_lea.vmem [#allocation6], %s218
          %s220 = smul.u32 8, %s26
          %s222 = ssub.s32 1024, 1024
          %223 = vsyncadd %s216, %s222
          %s224 = smul.addr %s220, 2
          %s225 = sadd.s32 %s25, %s224
          %s226 = smul.addr %s225, 128
          %s227 = scalar_lea.hbm %s1, %s226
          %s228 = sshll.u32 %s219, 4
          %s229 = int_to_ptr.vmem [resolvable:$true] %s228
          %234 = dma.hbm_to_vmem [thread:$0]  %s227, 1024, %s229, %s216, 256, 128, 8
        $region24: #{tpu_custom_call.1} parent=19 // pred_fallthru
          _
        // Predicated region
        $region25: #{tpu_custom_call.1} parent=19 // pred_check
          %p235 = pneg %p114
        $region26: #{tpu_custom_call.1} parent=19 // pred_check_branch
          %237 = sbr.rel (%p235) target = $region28
        $region27: #{tpu_custom_call.1} parent=19 // pred_region
          %s238 = sand.u32 %s17, 1
          %s239 = scalar_lea.sflag [#allocation7], %s238
          %s240 = sand.u32 %s104, 1
          %s241 = smul.addr %s240, 16
          %s242 = scalar_lea.vmem [#allocation8], %s241
          %s243 = smul.u32 2, %s26
          %s245 = ssub.s32 256, 256
          %246 = vsyncadd %s239, %s245
          %s247 = smul.addr %s243, 2
          %s248 = sadd.s32 %s25, %s247
          %s249 = smul.addr %s248, 128
          %s250 = scalar_lea.hbm %s2, %s249
          %s251 = sshll.u32 %s242, 4
          %s252 = int_to_ptr.vmem [resolvable:$true] %s251
          %257 = dma.hbm_to_vmem [thread:$0]  %s250, 256, %s252, %s239, 256, 128, 8
        $region28: #{tpu_custom_call.1} parent=19 // pred_fallthru
          _
        // Predicated region
        $region29: #{tpu_custom_call.1} parent=19 // pred_check
          %p258 = pneg %p140
        $region30: #{tpu_custom_call.1} parent=19 // pred_check_branch
          %260 = sbr.rel (%p258) target = $region32
        $region31: #{tpu_custom_call.1} parent=19 // pred_region
          %p261 = scmp.lt.s32.totalorder %s25, 1
          %s262 = scalar_select %p261, %s25, 1
          %s263 = scalar_lea.vmem %s3, %s262
        $region32: #{tpu_custom_call.1} parent=19 // pred_fallthru
          _
      $region20: #{tpu_custom_call.1} parent=5 // pred_fallthru
        _
      %p264 = scmp.le.s32.totalorder 1, %s17
      %p265 = scmp.lt.s32.totalorder %s17, 3
      %p266 = pnand %p264, %p265
      %p267 = pneg %p266
      // Predicated region
      $region33: #{tpu_custom_call.1} parent=5 // pred_check
        _
      $region34: #{tpu_custom_call.1} parent=5 // pred_check_branch
        %269 = sbr.rel (%p266) target = $region36
      $region35: #{tpu_custom_call.1} parent=5 // pred_region
        %s270 = ssub.s32 %s17, 1
        // Predicated region
        $region37: #{tpu_custom_call.1} parent=35 // pred_check
          %p271 = pneg %p64
        $region38: #{tpu_custom_call.1} parent=35 // pred_check_branch
          %273 = sbr.rel (%p271) target = $region40
        $region39: #{tpu_custom_call.1} parent=35 // pred_region
          %274 = dma.done [#allocation4], 512
        $region40: #{tpu_custom_call.1} parent=35 // pred_fallthru
          _
        %s275 = sand.u32 %s22, 1
        %s276 = scalar_lea.sflag [#allocation7], %s275
        %s277 = sand.u32 %s79, 1
        %s278 = smul.addr %s277, 64
        %s279 = scalar_lea.vmem [#allocation6], %s278
        // Predicated region
        $region41: #{tpu_custom_call.1} parent=35 // pred_check
          %p280 = pneg %p92
        $region42: #{tpu_custom_call.1} parent=35 // pred_check_branch
          %282 = sbr.rel (%p280) target = $region44
        $region43: #{tpu_custom_call.1} parent=35 // pred_region
          %283 = dma.done %s276, 1024
        $region44: #{tpu_custom_call.1} parent=35 // pred_fallthru
          _
        %s284 = sand.u32 %s22, 1
        %s285 = scalar_lea.sflag [#allocation7], %s284
        %s286 = sand.u32 %s107, 1
        %s287 = smul.addr %s286, 16
        %s288 = scalar_lea.vmem [#allocation8], %s287
        // Predicated region
        $region45: #{tpu_custom_call.1} parent=35 // pred_check
          %p289 = pneg %p120
        $region46: #{tpu_custom_call.1} parent=35 // pred_check_branch
          %291 = sbr.rel (%p289) target = $region48
        $region47: #{tpu_custom_call.1} parent=35 // pred_region
          %292 = dma.done %s285, 256
        $region48: #{tpu_custom_call.1} parent=35 // pred_fallthru
          _
        %p293 = pneg %p64
        %p294 = pneg %p61
        %s295 = sand.u32 %s22, 1
        %s296 = scalar_lea.sflag [#allocation7], %s295
        %s297 = sand.u32 %s79, 1
        %s298 = smul.addr %s297, 64
        %s299 = scalar_lea.vmem [#allocation6], %s298
        %p300 = pneg %p92
        %p301 = pneg %p89
        %s302 = sand.u32 %s22, 1
        %s303 = scalar_lea.sflag [#allocation7], %s302
        %s304 = sand.u32 %s107, 1
        %s305 = smul.addr %s304, 16
        %s306 = scalar_lea.vmem [#allocation8], %s305
        %p307 = pneg %p120
        %p308 = pneg %p117
        %p309 = scmp.lt.s32.totalorder %s28, 1
        %s310 = scalar_select %p309, %s28, 1
        %s311 = scalar_lea.vmem %s3, %s310
        %p312 = pneg %p146
        %p313 = pneg %p143
        %p314 = pneg %p174
        %p315 = pneg %p171
        %s316 = sand.u32 %s161, 1
        %s317 = scalar_lea.sflag [#allocation5], %s316
        %s318 = sand.u32 %s161, 1
        %s319 = smul.addr %s318, 8
        %s320 = scalar_lea.vmem [#allocation9], %s319
        %s321 = smul.u32 2, %s27
        %s322 = smul.u32 4, %s29
        %s323 = smul.u32 8, %s29
        %s324 = smul.u32 2, %s29
        %p325 = scmp.lt.s32.totalorder %s28, 1
        %s326 = scalar_select %p325, %s28, 1
        %s327 = scalar_lea.vmem %s3, %s326
        %s328 = smul.u32 2, %s27
        %p330 = scmp.eq.s32.totalorder %s29, 0
        // Predicated region
        $region49: #{tpu_custom_call.1} parent=35 // pred_check
          %p331 = pneg %p330
        $region50: #{tpu_custom_call.1} parent=35 // pred_check_branch
          %333 = sbr.rel (%p331) target = $region52
        $region51: #{tpu_custom_call.1} parent=35 // pred_region
          %334 = vst [vmem:[#allocation2] sm:$0xff] 0.0
          %335 = vst [vmem:[#allocation2 + $0x8] sm:$0xff] 0.0
        $region52: #{tpu_custom_call.1} parent=35 // pred_fallthru
          _
        %v336 = vld [vmem:[%s279] sm:$0xff]
        %v337 = vld [vmem:[%s279 + $0x8] sm:$0xff]
        %v338 = vld [vmem:[%s279 + $0x10] sm:$0xff]
        %v339 = vld [vmem:[%s279 + $0x18] sm:$0xff]
        %v340 = vld [vmem:[%s279 + $0x20] sm:$0xff]
        %v341 = vld [vmem:[%s279 + $0x28] sm:$0xff]
        %v342 = vld [vmem:[%s279 + $0x30] sm:$0xff]
        %v343 = vld [vmem:[%s279 + $0x38] sm:$0xff]
        %v344 = vshll.u32 %v336, 28
        %v345 = vshll.u32 %v337, 28
        %v346 = vshll.u32 %v338, 28
        %v347 = vshll.u32 %v339, 28
        %v348 = vshll.u32 %v340, 28
        %v349 = vshll.u32 %v341, 28
        %v350 = vshll.u32 %v342, 28
        %v351 = vshll.u32 %v343, 28
        %v352 = vshra.s32 %v344, 28
        %v353 = vshra.s32 %v345, 28
        %v354 = vshra.s32 %v346, 28
        %v355 = vshra.s32 %v347, 28
        %v356 = vshra.s32 %v348, 28
        %v357 = vshra.s32 %v349, 28
        %v358 = vshra.s32 %v350, 28
        %v359 = vshra.s32 %v351, 28
        %v360 = vshll.u32 %v336, 24
        %v361 = vshll.u32 %v337, 24
        %v362 = vshll.u32 %v338, 24
        %v363 = vshll.u32 %v339, 24
        %v364 = vshll.u32 %v340, 24
        %v365 = vshll.u32 %v341, 24
        %v366 = vshll.u32 %v342, 24
        %v367 = vshll.u32 %v343, 24
        %v368 = vshra.s32 %v360, 28
        %v369 = vshra.s32 %v361, 28
        %v370 = vshra.s32 %v362, 28
        %v371 = vshra.s32 %v363, 28
        %v372 = vshra.s32 %v364, 28
        %v373 = vshra.s32 %v365, 28
        %v374 = vshra.s32 %v366, 28
        %v375 = vshra.s32 %v367, 28
        %v376 = vshll.u32 %v336, 20
        %v377 = vshll.u32 %v337, 20
        %v378 = vshll.u32 %v338, 20
        %v379 = vshll.u32 %v339, 20
        %v380 = vshll.u32 %v340, 20
        %v381 = vshll.u32 %v341, 20
        %v382 = vshll.u32 %v342, 20
        %v383 = vshll.u32 %v343, 20
        %v384 = vshra.s32 %v376, 28
        %v385 = vshra.s32 %v377, 28
        %v386 = vshra.s32 %v378, 28
        %v387 = vshra.s32 %v379, 28
        %v388 = vshra.s32 %v380, 28
        %v389 = vshra.s32 %v381, 28
        %v390 = vshra.s32 %v382, 28
        %v391 = vshra.s32 %v383, 28
        %v392 = vshll.u32 %v336, 16
        %v393 = vshll.u32 %v337, 16
        %v394 = vshll.u32 %v338, 16
        %v395 = vshll.u32 %v339, 16
        %v396 = vshll.u32 %v340, 16
        %v397 = vshll.u32 %v341, 16
        %v398 = vshll.u32 %v342, 16
        %v399 = vshll.u32 %v343, 16
        %v400 = vshra.s32 %v392, 28
        %v401 = vshra.s32 %v393, 28
        %v402 = vshra.s32 %v394, 28
        %v403 = vshra.s32 %v395, 28
        %v404 = vshra.s32 %v396, 28
        %v405 = vshra.s32 %v397, 28
        %v406 = vshra.s32 %v398, 28
        %v407 = vshra.s32 %v399, 28
        %v408 = vshll.u32 %v336, 12
        %v409 = vshll.u32 %v337, 12
        %v410 = vshll.u32 %v338, 12
        %v411 = vshll.u32 %v339, 12
        %v412 = vshll.u32 %v340, 12
        %v413 = vshll.u32 %v341, 12
        %v414 = vshll.u32 %v342, 12
        %v415 = vshll.u32 %v343, 12
        %v416 = vshra.s32 %v408, 28
        %v417 = vshra.s32 %v409, 28
        %v418 = vshra.s32 %v410, 28
        %v419 = vshra.s32 %v411, 28
        %v420 = vshra.s32 %v412, 28
        %v421 = vshra.s32 %v413, 28
        %v422 = vshra.s32 %v414, 28
        %v423 = vshra.s32 %v415, 28
        %v424 = vshll.u32 %v336, 8
        %v425 = vshll.u32 %v337, 8
        %v426 = vshll.u32 %v338, 8
        %v427 = vshll.u32 %v339, 8
        %v428 = vshll.u32 %v340, 8
        %v429 = vshll.u32 %v341, 8
        %v430 = vshll.u32 %v342, 8
        %v431 = vshll.u32 %v343, 8
        %v432 = vshra.s32 %v424, 28
        %v433 = vshra.s32 %v425, 28
        %v434 = vshra.s32 %v426, 28
        %v435 = vshra.s32 %v427, 28
        %v436 = vshra.s32 %v428, 28
        %v437 = vshra.s32 %v429, 28
        %v438 = vshra.s32 %v430, 28
        %v439 = vshra.s32 %v431, 28
        %v440 = vshll.u32 %v336, 4
        %v441 = vshll.u32 %v337, 4
        %v442 = vshll.u32 %v338, 4
        %v443 = vshll.u32 %v339, 4
        %v444 = vshll.u32 %v340, 4
        %v445 = vshll.u32 %v341, 4
        %v446 = vshll.u32 %v342, 4
        %v447 = vshll.u32 %v343, 4
        %v448 = vshra.s32 %v440, 28
        %v449 = vshra.s32 %v441, 28
        %v450 = vshra.s32 %v442, 28
        %v451 = vshra.s32 %v443, 28
        %v452 = vshra.s32 %v444, 28
        %v453 = vshra.s32 %v445, 28
        %v454 = vshra.s32 %v446, 28
        %v455 = vshra.s32 %v447, 28
        %v456 = vshra.s32 %v336, 28
        %v457 = vshra.s32 %v337, 28
        %v458 = vshra.s32 %v338, 28
        %v459 = vshra.s32 %v339, 28
        %v460 = vshra.s32 %v340, 28
        %v461 = vshra.s32 %v341, 28
        %v462 = vshra.s32 %v342, 28
        %v463 = vshra.s32 %v343, 28
        %v464 = vld [vmem:[%s288] sm:$0xff]
        %v465 = vld [vmem:[%s288 + $0x8] sm:$0xff]
        %v468 = vcombine.high %v464, %v464
        %v470 = vunpack.c.l.s4 1966171168
        %v471 = vunpack.c.0.s8 %v470
        %v472 = vlaneseq
        %v473 = vshrl.u32 %v472, 7
        %v474 = vsub.s32 %v471, %v473
        %v475 = vrot.slane %v464, %v474
        %v477 = vunpack.c.l.s4 1966171168
        %v478 = vunpack.c.0.s8 %v477
        %v479 = vlaneseq
        %v480 = vshrl.u32 %v479, 7
        %v481 = vsub.s32 %v478, %v480
        %v482 = vrot.slane %v468, %v481
        %v483 = vcombine.high %v475, %v475
        %v484 = vcombine.high %v482, %v482
        %v486 = vunpack.c.l.s4 1966171168
        %v487 = vunpack.c.0.s8 %v486
        %v488 = vlaneseq
        %v489 = vshrl.u32 %v488, 7
        %v490 = vsub.s32 %v487, %v489
        %v491 = vrot.slane %v475, %v490
        %v493 = vunpack.c.l.s4 1966171168
        %v494 = vunpack.c.0.s8 %v493
        %v495 = vlaneseq
        %v496 = vshrl.u32 %v495, 7
        %v497 = vsub.s32 %v494, %v496
        %v498 = vrot.slane %v482, %v497
        %v500 = vunpack.c.l.s4 1966171168
        %v501 = vunpack.c.0.s8 %v500
        %v502 = vlaneseq
        %v503 = vshrl.u32 %v502, 7
        %v504 = vsub.s32 %v501, %v503
        %v505 = vrot.slane %v483, %v504
        %v507 = vunpack.c.l.s4 1966171168
        %v508 = vunpack.c.0.s8 %v507
        %v509 = vlaneseq
        %v510 = vshrl.u32 %v509, 7
        %v511 = vsub.s32 %v508, %v510
        %v512 = vrot.slane %v484, %v511
        %v513 = vcombine.high %v491, %v491
        %v514 = vcombine.high %v498, %v498
        %v515 = vcombine.high %v505, %v505
        %v516 = vcombine.high %v512, %v512
        %v517 = vcombine.high %v465, %v465
        %v519 = vunpack.c.l.s4 1966171168
        %v520 = vunpack.c.0.s8 %v519
        %v521 = vlaneseq
        %v522 = vshrl.u32 %v521, 7
        %v523 = vsub.s32 %v520, %v522
        %v524 = vrot.slane %v465, %v523
        %v526 = vunpack.c.l.s4 1966171168
        %v527 = vunpack.c.0.s8 %v526
        %v528 = vlaneseq
        %v529 = vshrl.u32 %v528, 7
        %v530 = vsub.s32 %v527, %v529
        %v531 = vrot.slane %v517, %v530
        %v532 = vcombine.high %v524, %v524
        %v533 = vcombine.high %v531, %v531
        %v535 = vunpack.c.l.s4 1966171168
        %v536 = vunpack.c.0.s8 %v535
        %v537 = vlaneseq
        %v538 = vshrl.u32 %v537, 7
        %v539 = vsub.s32 %v536, %v538
        %v540 = vrot.slane %v524, %v539
        %v542 = vunpack.c.l.s4 1966171168
        %v543 = vunpack.c.0.s8 %v542
        %v544 = vlaneseq
        %v545 = vshrl.u32 %v544, 7
        %v546 = vsub.s32 %v543, %v545
        %v547 = vrot.slane %v531, %v546
        %v549 = vunpack.c.l.s4 1966171168
        %v550 = vunpack.c.0.s8 %v549
        %v551 = vlaneseq
        %v552 = vshrl.u32 %v551, 7
        %v553 = vsub.s32 %v550, %v552
        %v554 = vrot.slane %v532, %v553
        %v556 = vunpack.c.l.s4 1966171168
        %v557 = vunpack.c.0.s8 %v556
        %v558 = vlaneseq
        %v559 = vshrl.u32 %v558, 7
        %v560 = vsub.s32 %v557, %v559
        %v561 = vrot.slane %v533, %v560
        %v562 = vcombine.high %v540, %v540
        %v563 = vcombine.high %v547, %v547
        %v564 = vcombine.high %v554, %v554
        %v565 = vcombine.high %v561, %v561
        %v566 = vlaneseq
        %v567 = vshrl.u32 %v566, 7
        %v568 = vsub.s32 0, %v567
        %v569 = vrot.slane %v491, %v568
        %v570 = vlaneseq
        %v571 = vshrl.u32 %v570, 7
        %v572 = vsub.s32 0, %v571
        %v573 = vrot.slane %v505, %v572
        %v574 = vlaneseq
        %v575 = vshrl.u32 %v574, 7
        %v576 = vsub.s32 0, %v575
        %v577 = vrot.slane %v513, %v576
        %v578 = vlaneseq
        %v579 = vshrl.u32 %v578, 7
        %v580 = vsub.s32 0, %v579
        %v581 = vrot.slane %v515, %v580
        %v582 = vlaneseq
        %v583 = vshrl.u32 %v582, 7
        %v584 = vsub.s32 0, %v583
        %v585 = vrot.slane %v498, %v584
        %v586 = vlaneseq
        %v587 = vshrl.u32 %v586, 7
        %v588 = vsub.s32 0, %v587
        %v589 = vrot.slane %v512, %v588
        %v590 = vlaneseq
        %v591 = vshrl.u32 %v590, 7
        %v592 = vsub.s32 0, %v591
        %v593 = vrot.slane %v514, %v592
        %v594 = vlaneseq
        %v595 = vshrl.u32 %v594, 7
        %v596 = vsub.s32 0, %v595
        %v597 = vrot.slane %v516, %v596
        %v598 = vlaneseq
        %v599 = vshrl.u32 %v598, 7
        %v600 = vsub.s32 0, %v599
        %v601 = vrot.slane %v540, %v600
        %v602 = vlaneseq
        %v603 = vshrl.u32 %v602, 7
        %v604 = vsub.s32 0, %v603
        %v605 = vrot.slane %v554, %v604
        %v606 = vlaneseq
        %v607 = vshrl.u32 %v606, 7
        %v608 = vsub.s32 0, %v607
        %v609 = vrot.slane %v562, %v608
        %v610 = vlaneseq
        %v611 = vshrl.u32 %v610, 7
        %v612 = vsub.s32 0, %v611
        %v613 = vrot.slane %v564, %v612
        %v614 = vlaneseq
        %v615 = vshrl.u32 %v614, 7
        %v616 = vsub.s32 0, %v615
        %v617 = vrot.slane %v547, %v616
        %v618 = vlaneseq
        %v619 = vshrl.u32 %v618, 7
        %v620 = vsub.s32 0, %v619
        %v621 = vrot.slane %v561, %v620
        %v622 = vlaneseq
        %v623 = vshrl.u32 %v622, 7
        %v624 = vsub.s32 0, %v623
        %v625 = vrot.slane %v563, %v624
        %v626 = vlaneseq
        %v627 = vshrl.u32 %v626, 7
        %v628 = vsub.s32 0, %v627
        %v629 = vrot.slane %v565, %v628
        %v646 = vcvt.s32.f32 %v352
        %v647 = vcvt.s32.f32 %v353
        %v648 = vcvt.s32.f32 %v354
        %v649 = vcvt.s32.f32 %v355
        %v650 = vcvt.s32.f32 %v356
        %v651 = vcvt.s32.f32 %v357
        %v652 = vcvt.s32.f32 %v358
        %v653 = vcvt.s32.f32 %v359
        %v654 = vcvt.s32.f32 %v368
        %v655 = vcvt.s32.f32 %v369
        %v656 = vcvt.s32.f32 %v370
        %v657 = vcvt.s32.f32 %v371
        %v658 = vcvt.s32.f32 %v372
        %v659 = vcvt.s32.f32 %v373
        %v660 = vcvt.s32.f32 %v374
        %v661 = vcvt.s32.f32 %v375
        %v662 = vcvt.s32.f32 %v384
        %v663 = vcvt.s32.f32 %v385
        %v664 = vcvt.s32.f32 %v386
        %v665 = vcvt.s32.f32 %v387
        %v666 = vcvt.s32.f32 %v388
        %v667 = vcvt.s32.f32 %v389
        %v668 = vcvt.s32.f32 %v390
        %v669 = vcvt.s32.f32 %v391
        %v670 = vcvt.s32.f32 %v400
        %v671 = vcvt.s32.f32 %v401
        %v672 = vcvt.s32.f32 %v402
        %v673 = vcvt.s32.f32 %v403
        %v674 = vcvt.s32.f32 %v404
        %v675 = vcvt.s32.f32 %v405
        %v676 = vcvt.s32.f32 %v406
        %v677 = vcvt.s32.f32 %v407
        %v678 = vcvt.s32.f32 %v416
        %v679 = vcvt.s32.f32 %v417
        %v680 = vcvt.s32.f32 %v418
        %v681 = vcvt.s32.f32 %v419
        %v682 = vcvt.s32.f32 %v420
        %v683 = vcvt.s32.f32 %v421
        %v684 = vcvt.s32.f32 %v422
        %v685 = vcvt.s32.f32 %v423
        %v686 = vcvt.s32.f32 %v432
        %v687 = vcvt.s32.f32 %v433
        %v688 = vcvt.s32.f32 %v434
        %v689 = vcvt.s32.f32 %v435
        %v690 = vcvt.s32.f32 %v436
        %v691 = vcvt.s32.f32 %v437
        %v692 = vcvt.s32.f32 %v438
        %v693 = vcvt.s32.f32 %v439
        %v694 = vcvt.s32.f32 %v448
        %v695 = vcvt.s32.f32 %v449
        %v696 = vcvt.s32.f32 %v450
        %v697 = vcvt.s32.f32 %v451
        %v698 = vcvt.s32.f32 %v452
        %v699 = vcvt.s32.f32 %v453
        %v700 = vcvt.s32.f32 %v454
        %v701 = vcvt.s32.f32 %v455
        %v702 = vcvt.s32.f32 %v456
        %v703 = vcvt.s32.f32 %v457
        %v704 = vcvt.s32.f32 %v458
        %v705 = vcvt.s32.f32 %v459
        %v706 = vcvt.s32.f32 %v460
        %v707 = vcvt.s32.f32 %v461
        %v708 = vcvt.s32.f32 %v462
        %v709 = vcvt.s32.f32 %v463
        %v710 = vmul.f32 %v646, %v569
        %v711 = vmul.f32 %v647, %v569
        %v712 = vmul.f32 %v648, %v569
        %v713 = vmul.f32 %v649, %v569
        %v714 = vmul.f32 %v650, %v573
        %v715 = vmul.f32 %v651, %v573
        %v716 = vmul.f32 %v652, %v573
        %v717 = vmul.f32 %v653, %v573
        %v718 = vmul.f32 %v654, %v577
        %v719 = vmul.f32 %v655, %v577
        %v720 = vmul.f32 %v656, %v577
        %v721 = vmul.f32 %v657, %v577
        %v722 = vmul.f32 %v658, %v581
        %v723 = vmul.f32 %v659, %v581
        %v724 = vmul.f32 %v660, %v581
        %v725 = vmul.f32 %v661, %v581
        %v726 = vmul.f32 %v662, %v585
        %v727 = vmul.f32 %v663, %v585
        %v728 = vmul.f32 %v664, %v585
        %v729 = vmul.f32 %v665, %v585
        %v730 = vmul.f32 %v666, %v589
        %v731 = vmul.f32 %v667, %v589
        %v732 = vmul.f32 %v668, %v589
        %v733 = vmul.f32 %v669, %v589
        %v734 = vmul.f32 %v670, %v593
        %v735 = vmul.f32 %v671, %v593
        %v736 = vmul.f32 %v672, %v593
        %v737 = vmul.f32 %v673, %v593
        %v738 = vmul.f32 %v674, %v597
        %v739 = vmul.f32 %v675, %v597
        %v740 = vmul.f32 %v676, %v597
        %v741 = vmul.f32 %v677, %v597
        %v742 = vmul.f32 %v678, %v601
        %v743 = vmul.f32 %v679, %v601
        %v744 = vmul.f32 %v680, %v601
        %v745 = vmul.f32 %v681, %v601
        %v746 = vmul.f32 %v682, %v605
        %v747 = vmul.f32 %v683, %v605
        %v748 = vmul.f32 %v684, %v605
        %v749 = vmul.f32 %v685, %v605
        %v750 = vmul.f32 %v686, %v609
        %v751 = vmul.f32 %v687, %v609
        %v752 = vmul.f32 %v688, %v609
        %v753 = vmul.f32 %v689, %v609
        %v754 = vmul.f32 %v690, %v613
        %v755 = vmul.f32 %v691, %v613
        %v756 = vmul.f32 %v692, %v613
        %v757 = vmul.f32 %v693, %v613
        %v758 = vmul.f32 %v694, %v617
        %v759 = vmul.f32 %v695, %v617
        %v760 = vmul.f32 %v696, %v617
        %v761 = vmul.f32 %v697, %v617
        %v762 = vmul.f32 %v698, %v621
        %v763 = vmul.f32 %v699, %v621
        %v764 = vmul.f32 %v700, %v621
        %v765 = vmul.f32 %v701, %v621
        %v766 = vmul.f32 %v702, %v625
        %v767 = vmul.f32 %v703, %v625
        %v768 = vmul.f32 %v704, %v625
        %v769 = vmul.f32 %v705, %v625
        %v770 = vmul.f32 %v706, %v629
        %v771 = vmul.f32 %v707, %v629
        %v772 = vmul.f32 %v708, %v629
        %v773 = vmul.f32 %v709, %v629
        %v774 = vpack.c.bf16 %v711, %v710
        %v775 = vpack.c.bf16 %v713, %v712
        %v776 = vpack.c.bf16 %v715, %v714
        %v777 = vpack.c.bf16 %v717, %v716
        %v778 = vpack.c.bf16 %v719, %v718
        %v779 = vpack.c.bf16 %v721, %v720
        %v780 = vpack.c.bf16 %v723, %v722
        %v781 = vpack.c.bf16 %v725, %v724
        %v782 = vpack.c.bf16 %v727, %v726
        %v783 = vpack.c.bf16 %v729, %v728
        %v784 = vpack.c.bf16 %v731, %v730
        %v785 = vpack.c.bf16 %v733, %v732
        %v786 = vpack.c.bf16 %v735, %v734
        %v787 = vpack.c.bf16 %v737, %v736
        %v788 = vpack.c.bf16 %v739, %v738
        %v789 = vpack.c.bf16 %v741, %v740
        %v790 = vpack.c.bf16 %v743, %v742
        %v791 = vpack.c.bf16 %v745, %v744
        %v792 = vpack.c.bf16 %v747, %v746
        %v793 = vpack.c.bf16 %v749, %v748
        %v794 = vpack.c.bf16 %v751, %v750
        %v795 = vpack.c.bf16 %v753, %v752
        %v796 = vpack.c.bf16 %v755, %v754
        %v797 = vpack.c.bf16 %v757, %v756
        %v798 = vpack.c.bf16 %v759, %v758
        %v799 = vpack.c.bf16 %v761, %v760
        %v800 = vpack.c.bf16 %v763, %v762
        %v801 = vpack.c.bf16 %v765, %v764
        %v802 = vpack.c.bf16 %v767, %v766
        %v803 = vpack.c.bf16 %v769, %v768
        %v804 = vpack.c.bf16 %v771, %v770
        %v805 = vpack.c.bf16 %v773, %v772
        %v806 = vld [vmem:[#allocation2] sm:$0xff]
        %v807 = vld [vmem:[#allocation2 + $0x8] sm:$0xff]
        %v808 = vld [vmem:[#allocation3] sm:$0xff]
        %v809 = vld [vmem:[#allocation3 + $0x8] sm:$0xff]
        %v810 = vld [vmem:[#allocation3 + $0x10] sm:$0xff]
        %v811 = vld [vmem:[#allocation3 + $0x18] sm:$0xff]
        %v816 = vunpack.c.l.b16 %v808
        %v817 = vunpack.c.h.b16 %v808
        %v818 = vunpack.c.l.b16 %v809
        %v819 = vunpack.c.h.b16 %v809
        %v820 = vunpack.c.l.b16 %v810
        %v821 = vunpack.c.h.b16 %v810
        %v822 = vunpack.c.l.b16 %v811
        %v823 = vunpack.c.h.b16 %v811
        %v824 = vpack.c.b16 %v820, %v816
        %v825 = vpack.c.b16 %v821, %v817
        %v826 = vpack.c.b16 %v822, %v818
        %v827 = vpack.c.b16 %v823, %v819
        %832 = vmatprep.subr.bf16.mxu0 0
        %833 = vmatpush1.bf16.msra.mxu0 %v774
        %834 = vmatprep.subr.bf16.mxu0 0
        %835 = vmatpush1.bf16.msra.mxu0 %v775
        %836 = vmatprep.subr.bf16.mxu0 0
        %837 = vmatpush1.bf16.msra.mxu0 %v776
        %838 = vmatprep.subr.bf16.mxu0 0
        %839 = vmatpush1.bf16.msra.mxu0 %v777
        %840 = vmatprep.subr.bf16.mxu0 0
        %841 = vmatpush1.bf16.msra.mxu0 %v778
        %842 = vmatprep.subr.bf16.mxu0 0
        %843 = vmatpush1.bf16.msra.mxu0 %v779
        %844 = vmatprep.subr.bf16.mxu0 0
        %845 = vmatpush1.bf16.msra.mxu0 %v780
        %846 = vmatprep.subr.bf16.mxu0 0
        %847 = vmatpush1.bf16.msra.mxu0 %v781
        %848 = vmatprep.subr.bf16.mxu0 0
        %849 = vmatpush1.bf16.msra.mxu0 %v782
        %850 = vmatprep.subr.bf16.mxu0 0
        %851 = vmatpush1.bf16.msra.mxu0 %v783
        %852 = vmatprep.subr.bf16.mxu0 0
        %853 = vmatpush1.bf16.msra.mxu0 %v784
        %854 = vmatprep.subr.bf16.mxu0 0
        %855 = vmatpush1.bf16.msra.mxu0 %v785
        %856 = vmatprep.subr.bf16.mxu0 0
        %857 = vmatpush1.bf16.msra.mxu0 %v786
        %858 = vmatprep.subr.bf16.mxu0 0
        %859 = vmatpush1.bf16.msra.mxu0 %v787
        %860 = vmatprep.subr.bf16.mxu0 0
        %861 = vmatpush1.bf16.msra.mxu0 %v788
        %862 = vmatprep.subr.bf16.mxu0 0
        %863 = vmatpush1.bf16.msra.mxu0 %v789
        %864 = vmatprep.mubr.bf16.mxu0 %v825
        %865 = vmatmul.mubr.bf16.gmra.mrb[0].mxu0 %v824
        %v866 = vpop.f32.mrb[0].mxu0
        %v867 = vadd.f32 0.0, %v866
        %v868 = vpop.f32.mrb[0].mxu0
        %v869 = vpop.f32.mrb[0].mxu0
        %v870 = vadd.f32 0.0, %v869
        %v871 = vpop.f32.mrb[0].mxu0
        %872 = vdwg.mxu0
        %873 = vmatprep.subr.bf16.mxu0 0
        %874 = vmatpush1.bf16.msra.mxu0 %v790
        %875 = vmatprep.subr.bf16.mxu0 0
        %876 = vmatpush1.bf16.msra.mxu0 %v791
        %877 = vmatprep.subr.bf16.mxu0 0
        %878 = vmatpush1.bf16.msra.mxu0 %v792
        %879 = vmatprep.subr.bf16.mxu0 0
        %880 = vmatpush1.bf16.msra.mxu0 %v793
        %881 = vmatprep.subr.bf16.mxu0 0
        %882 = vmatpush1.bf16.msra.mxu0 %v794
        %883 = vmatprep.subr.bf16.mxu0 0
        %884 = vmatpush1.bf16.msra.mxu0 %v795
        %885 = vmatprep.subr.bf16.mxu0 0
        %886 = vmatpush1.bf16.msra.mxu0 %v796
        %887 = vmatprep.subr.bf16.mxu0 0
        %888 = vmatpush1.bf16.msra.mxu0 %v797
        %889 = vmatprep.subr.bf16.mxu0 0
        %890 = vmatpush1.bf16.msra.mxu0 %v798
        %891 = vmatprep.subr.bf16.mxu0 0
        %892 = vmatpush1.bf16.msra.mxu0 %v799
        %893 = vmatprep.subr.bf16.mxu0 0
        %894 = vmatpush1.bf16.msra.mxu0 %v800
        %895 = vmatprep.subr.bf16.mxu0 0
        %896 = vmatpush1.bf16.msra.mxu0 %v801
        %897 = vmatprep.subr.bf16.mxu0 0
        %898 = vmatpush1.bf16.msra.mxu0 %v802
        %899 = vmatprep.subr.bf16.mxu0 0
        %900 = vmatpush1.bf16.msra.mxu0 %v803
        %901 = vmatprep.subr.bf16.mxu0 0
        %902 = vmatpush1.bf16.msra.mxu0 %v804
        %903 = vmatprep.subr.bf16.mxu0 0
        %904 = vmatpush1.bf16.msra.mxu0 %v805
        %905 = vmatprep.mubr.bf16.mxu0 %v827
        %906 = vmatmul.mubr.bf16.gmra.mrb[0].mxu0 %v826
        %v907 = vpop.f32.mrb[0].mxu0
        %v908 = vadd.f32 %v867, %v907
        %v909 = vpop.f32.mrb[0].mxu0
        %v910 = vpop.f32.mrb[0].mxu0
        %v911 = vadd.f32 %v870, %v910
        %v912 = vpop.f32.mrb[0].mxu0
        %913 = vdwg.mxu0
        %v914 = vadd.f32 %v806, %v908
        %v915 = vadd.f32 %v807, %v911
        %916 = vst [vmem:[#allocation2] sm:$0xff] %v914
        %917 = vst [vmem:[#allocation2 + $0x8] sm:$0xff] %v915
        // Predicated region
        $region53: #{tpu_custom_call.1} parent=35 // pred_check
          %p918 = pneg %p330
        $region54: #{tpu_custom_call.1} parent=35 // pred_check_branch
          %920 = sbr.rel (%p918) target = $region56
        $region55: #{tpu_custom_call.1} parent=35 // pred_region
          %v921 = vld [vmem:[#allocation2] sm:$0xff]
          %v922 = vld [vmem:[#allocation2 + $0x8] sm:$0xff]
          %v923 = vld [vmem:[%s327] sm:$0x1]
          %v925 = vlaneseq
          %v926 = vshrl.u32 %v925, 7
          %v927 = vsub.s32 0, %v926
          %v928 = vrot.slane %v923, %v927
          %v930 = vadd.f32 %v921, %v928
          %v931 = vadd.f32 %v922, %v928
          %v932 = vpack.c.bf16 %v931, %v930
          %v934 = vunpack.c.l.b16 %v932
          %v935 = vunpack.c.h.b16 %v932
          %v936 = vpack.c.b16 %v934, %v934
          %v937 = vpack.c.b16 %v935, %v935
          %940 = vst [vmem:[%s320] sm:$0xf] %v936
          %941 = vst [vmem:[%s320 + $0x4] sm:$0xf] %v937
        $region56: #{tpu_custom_call.1} parent=35 // pred_fallthru
          _
        %s942 = sand.u32 %s161, 1
        %s943 = scalar_lea.sflag [#allocation5], %s942
        %s944 = sand.u32 %s161, 1
        %s945 = smul.addr %s944, 8
        %s946 = scalar_lea.vmem [#allocation9], %s945
        // Predicated region
        $region57: #{tpu_custom_call.1} parent=35 // pred_check
          %p947 = pneg %p171
        $region58: #{tpu_custom_call.1} parent=35 // pred_check_branch
          %949 = sbr.rel (%p947) target = $region60
        $region59: #{tpu_custom_call.1} parent=35 // pred_region
          %s950 = smul.u32 2, %s27
          %s952 = ssub.s32 128, 128
          %953 = vsyncadd %s943, %s952
          %s954 = smul.addr %s950, 2
          %s955 = sadd.s32 %s28, %s954
          %s956 = smul.addr %s955, 64
          %s957 = scalar_lea.hbm %s4, %s956
          %s958 = sshll.u32 %s946, 4
          %s959 = int_to_ptr.vmem [resolvable:$true] %s958
          %964 = dma.vmem_to_hbm [thread:$0]  %s959, 128, %s957, %s943, 64, 128, 4
        $region60: #{tpu_custom_call.1} parent=35 // pred_fallthru
          _
      $region36: #{tpu_custom_call.1} parent=5 // pred_fallthru
        _
      %p965 = scmp.le.s32.totalorder 2, %s17
      // Predicated region
      $region61: #{tpu_custom_call.1} parent=5 // pred_check
        %p966 = pneg %p965
      $region62: #{tpu_custom_call.1} parent=5 // pred_check_branch
        %968 = sbr.rel (%p966) target = $region64
      $region63: #{tpu_custom_call.1} parent=5 // pred_region
        %s969 = ssub.s32 %s17, 2
        // Predicated region
        $region65: #{tpu_custom_call.1} parent=63 // pred_check
          %p970 = pneg %p177
        $region66: #{tpu_custom_call.1} parent=63 // pred_check_branch
          %972 = sbr.rel (%p970) target = $region68
        $region67: #{tpu_custom_call.1} parent=63 // pred_region
          %s973 = sand.u32 %s162, 1
          %s974 = scalar_lea.sflag [#allocation5], %s973
          %s975 = sand.u32 %s162, 1
          %s976 = smul.addr %s975, 8
          %s977 = scalar_lea.vmem [#allocation9], %s976
          %978 = dma.done %s974, 128
        $region68: #{tpu_custom_call.1} parent=63 // pred_fallthru
          _
      $region64: #{tpu_custom_call.1} parent=5 // pred_fallthru
        _
    $region6: #{tpu_custom_call.1} parent=1 // loop_footer
      %s21 = sadd.s32 1, %s17
    $region7: #{tpu_custom_call.1} parent=1 // loop_footer_branch
      %16 = sbr.rel target = $region3
    $region8: #{tpu_custom_call.1} parent=1 // loop_exit
      _
    %979 = vsyncpa [#allocation4], 1
    %s980 = scalar_lea.sflag [#allocation4], 1
    %981 = vsyncpa %s980, 1
    %982 = vsyncpa [#allocation7], 1
    %s983 = scalar_lea.sflag [#allocation7], 1
    %984 = vsyncpa %s983, 1
    %985 = vsyncpa [#allocation5], 1
    %s986 = scalar_lea.sflag [#allocation5], 1
    %987 = vsyncpa %s986, 1

</llo_original>
